<compile_context>
chip_gen: v6e
topology: v6e:2x2x1
jax: 0.10.0
libtpu: 0.0.40
codegen_flags: <defaults>
</compile_context>

<pallas_src>
import jax
import jax.numpy as jnp
from jax.experimental import pallas as pl
from jax.experimental.pallas import tpu as pltpu


def _tabular_encoder_kernel(x_ref, w_ref, b_ref, o_ref):
    # x_ref: (TB, D) VMEM activations (native dtype)
    # w_ref: (1, D)  VMEM weight row (resident across the whole grid)
    # b_ref: (1,)    SMEM scalar bias (f32)
    # o_ref: (1, 1, TB) lane-dense output row for this tile
    x = x_ref[...].astype(jnp.float32)
    w = w_ref[...].astype(jnp.float32)          # broadcasts over the TB rows
    y = jnp.sum(x * w, axis=-1) + b_ref[0]      # VPU mul + XLU lane reduce -> (TB,)
    y = jnp.maximum(y, 0.0)                     # ReLU in f32
    # Lane-dense store: sublane->lane relayout on the XLU (slack slot), turns
    # TB/8 masked column stores + sparse writeback DMA into dense row stores.
    o_ref[...] = y.reshape(o_ref.shape).astype(o_ref.dtype)


def _batch_dim_semantics():
    """CORE_PARALLEL only on v7x (2 TCs per chip); plain "parallel" elsewhere."""
    try:
        kind = jax.devices()[0].device_kind.lower()
    except Exception:
        kind = ""
    if "v7" in kind:
        return (pltpu.CORE_PARALLEL,)
    return ("parallel",)


def tabular_encoder_latefusion(x, weight, bias, *, block_batch=16384):
    """Pallas forward of nn.Sequential(nn.Linear(input_dim, 1), nn.ReLU()).

    Args:
      x:      [batch, input_dim]   (f32 or bf16)
      weight: [1, input_dim]       (PyTorch nn.Linear weight layout)
      bias:   [1]
    Returns:
      [batch, 1] with x's dtype.
    """
    batch, input_dim = x.shape
    out_dtype = x.dtype

    w_row = weight.reshape(1, input_dim)          # keep row layout, no transpose
    b = bias.reshape(1).astype(jnp.float32)       # scalar bias for SMEM

    # --- Tile-size selection --------------------------------------------------
    # Target ~4 MiB of (lane-padded) x per buffer so the per-grid-step overhead
    # is amortised and the pipeline sits near the HBM roofline.  The x block's
    # lane dim is padded to a multiple of 128 in VMEM, so size against that.
    padded_d = ((input_dim + 127) // 128) * 128
    bytes_per_row = padded_d * x.dtype.itemsize
    target_block_bytes = 4 * 1024 * 1024
    tb = min(block_batch, batch, max(128, target_block_bytes // bytes_per_row))
    if tb < batch:
        tb = max(8, (tb // 8) * 8)   # sublane multiple of 8 required when tiling
    num_tiles = pl.cdiv(batch, tb)

    out = pl.pallas_call(
        _tabular_encoder_kernel,
        out_shape=jax.ShapeDtypeStruct((num_tiles, 1, tb), out_dtype),
        grid_spec=pltpu.PrefetchScalarGridSpec(
            num_scalar_prefetch=0,
            grid=(num_tiles,),
            in_specs=[
                # x tiles: ragged last tile allowed (no wrapper-side padding);
                # garbage OOB rows stay row-local and are sliced off below.
                pl.BlockSpec((tb, input_dim), lambda i: (i, 0)),
                # weight row: same block every step -> resident in VMEM
                pl.BlockSpec((1, input_dim), lambda i: (0, 0)),
                # scalar bias on the scalar path
                pl.BlockSpec(memory_space=pltpu.MemorySpace.SMEM),
            ],
            out_specs=pl.BlockSpec((1, 1, tb), lambda i: (i, 0, 0)),
        ),
        compiler_params=pltpu.CompilerParams(
            dimension_semantics=_batch_dim_semantics(),
            vmem_limit_bytes=48 * 1024 * 1024,   # headroom on v7x (64 MiB physical)
        ),
    )(x, w_row, b)

    # Free contiguous reshape + cheap slice back to the PyTorch output shape.
    return out.reshape(num_tiles * tb)[:batch].reshape(batch, 1)


def _reference(x, weight, bias):
    return jnp.maximum(x.astype(jnp.float32) @ weight.T + bias, 0.0).astype(x.dtype)


if __name__ == "__main__":
    key = jax.random.PRNGKey(0)
    batch, input_dim = 8, 32  # nn.Linear output_dim is hard-coded to 1 in the module

    kx, kw, kb, kx2 = jax.random.split(key, 4)
    x = jax.random.normal(kx, (batch, input_dim), dtype=jnp.float32)
    weight = jax.random.normal(kw, (1, input_dim), dtype=jnp.float32) * 0.1
    bias = jax.random.normal(kb, (1,), dtype=jnp.float32) * 0.1

    out = jax.block_until_ready(tabular_encoder_latefusion(x, weight, bias))
    ref = _reference(x, weight, bias)
    assert out.shape == (batch, 1), out.shape
    assert jnp.allclose(out, ref, atol=1e-5, rtol=1e-5), "mismatch vs reference"

    # Exercise the multi-tile + ragged-last-tile path (no padding copy).
    batch2 = 300
    x2 = jax.random.normal(kx2, (batch2, input_dim), dtype=jnp.float32)
    out2 = jax.block_until_ready(
        tabular_encoder_latefusion(x2, weight, bias, block_batch=128))
    ref2 = _reference(x2, weight, bias)
    assert out2.shape == (batch2, 1), out2.shape
    assert jnp.allclose(out2, ref2, atol=1e-5, rtol=1e-5), "ragged-tile mismatch"

    print("KERNEL_OK")
</pallas_src>

<mosaic_0001>
module attributes {stable_mosaic.version = 11 : i64} {
  func.func @_tabular_encoder_kernel(%arg0: i32, %arg1: memref<8x32xf32, #tpu.memory_space<vmem>>, %arg2: memref<1x32xf32, #tpu.memory_space<vmem>>, %arg3: memref<1xf32, #tpu.memory_space<smem>>, %arg4: memref<1x1x8xf32, #tpu.memory_space<vmem>>) attributes {dimension_semantics = [#tpu.dimension_semantics<parallel>], iteration_bounds = array<i64: 1>, scalar_prefetch = 0 : i64, scratch_operands = 0 : i64, tpu.core_type = #tpu.core_type<tc>, window_params = [{transform_indices = @transform_0, window_bounds = array<i64: 8, 32>}, {pipeline_mode = #tpu.pipeline_mode<synchronous>, transform_indices = @transform_1, window_bounds = array<i64: 1, 32>}, {transform_indices = @transform_2, window_bounds = array<i64: 1>}, {transform_indices = @transform_3, window_bounds = array<i64: 1, 1, 8>}]} {
    %c0 = arith.constant 0 : index
    %c0_0 = arith.constant 0 : index
    %0 = vector.load %arg1[%c0, %c0_0] : memref<8x32xf32, #tpu.memory_space<vmem>>, vector<8x32xf32>
    %c0_1 = arith.constant 0 : index
    %c0_2 = arith.constant 0 : index
    %1 = vector.load %arg2[%c0_1, %c0_2] : memref<1x32xf32, #tpu.memory_space<vmem>>, vector<1x32xf32>
    %2 = vector.broadcast %1 : vector<1x32xf32> to vector<8x32xf32>
    %3 = arith.mulf %0, %2 : vector<8x32xf32>
    %cst = arith.constant dense<0.000000e+00> : vector<8xf32>
    %4 = vector.multi_reduction <add>, %3, %cst [1] : vector<8x32xf32> to vector<8xf32>
    %c0_3 = arith.constant 0 : index
    %5 = memref.load %arg3[%c0_3] : memref<1xf32, #tpu.memory_space<smem>>
    %6 = vector.broadcast %5 : f32 to vector<8xf32>
    %7 = arith.addf %4, %6 : vector<8xf32>
    %cst_4 = arith.constant 0.000000e+00 : f32
    %8 = vector.broadcast %cst_4 : f32 to vector<8xf32>
    %9 = arith.maximumf %7, %8 : vector<8xf32>
    %10 = vector.shape_cast %9 : vector<8xf32> to vector<1x1x8xf32>
    %c0_5 = arith.constant 0 : index
    %c0_6 = arith.constant 0 : index
    %c0_7 = arith.constant 0 : index
    %11 = vector.load %arg4[%c0_5, %c0_6, %c0_7] : memref<1x1x8xf32, #tpu.memory_space<vmem>>, vector<1x1x8xf32>
    tpu.vector_store %arg4[%c0_5, %c0_6, %c0_7], %10 {strides = array<i32>} : memref<1x1x8xf32, #tpu.memory_space<vmem>>, vector<1x1x8xf32>,
    return
  }
  func.func @transform_0(%arg0: i32) -> (i32, i32) {
    %c0_i32 = arith.constant 0 : i32
    %c0_i32_0 = arith.constant 0 : i32
    return %arg0, %c0_i32 : i32, i32
  }
  func.func @transform_1(%arg0: i32) -> (i32, i32) {
    %c0_i32 = arith.constant 0 : i32
    %c0_i32_0 = arith.constant 0 : i32
    %c0_i32_1 = arith.constant 0 : i32
    return %c0_i32, %c0_i32_0 : i32, i32
  }
  func.func @transform_2(%arg0: i32) -> i32 {
    %c0_i32 = arith.constant 0 : i32
    %c0_i32_0 = arith.constant 0 : i32
    return %c0_i32 : i32
  }
  func.func @transform_3(%arg0: i32) -> (i32, i32, i32) {
    %c0_i32 = arith.constant 0 : i32
    %c0_i32_0 = arith.constant 0 : i32
    %c0_i32_1 = arith.constant 0 : i32
    return %arg0, %c0_i32, %c0_i32_0 : i32, i32, i32
  }
}

</mosaic_0001>

<llo_original>
// kernel: tpu_custom_call.1
$region0: #{tpu_custom_call.1}
  #allocation0 [shape = 'u32[]', space=smem, size = 0x4, offset = 0x4, fixed_abs, tag = 'smem constant byte address 0x4 - core index']
  #allocation1 [shape = 'u32[144,128]{1,0:T(1,128)}', space=vmem, size = 0x12000, scoped, tag = 'internal scratch']
  #allocation2 [shape = 'f32[1]{0:T(128)S(6)}', space=smem, size = 0x200, scoped, tag = 'scoped memory for tpu_custom_call.1']
  %s0 = inlined_call_operand.hbm [shape: f32[8,32], index: 0, kind: input, shape index: {}]
  %s1 = inlined_call_operand.vmem [shape: f32[1,32], index: 1, kind: input, shape index: {}]
  %s2 = inlined_call_operand.<no memory space> [shape: f32[1], index: 2, kind: input, shape index: {}]
  %s3 = inlined_call_operand.hbm [shape: f32[1,1,8], index: 3, kind: output, shape index: {}]
  %s4 = sld [smem:[#allocation0]]
  $region26: #{tpu_custom_call.1} parent=0
    _
  %s6 = ssub.s32 1, %s4
  %s7 = scalar_select 0, %s6, %s4
  %8 = sst [smem:[#allocation2]] %s2
  $region1: #{tpu_custom_call.1} parent=0
    #allocation3 [shape = 'u8[4096]{0}', space=vmem, size = 0x1000, scoped, tag = 'input window, operand 0, single buffered']
    #allocation4 [shape = 's32[1]{0}', space=sflag, size = 0x4, scoped, tag = 'scoped memory for tpu_custom_call.1']
    #allocation5 [shape = 's32[1]{0}', space=sflag, size = 0x4, scoped, tag = 'scoped memory for tpu_custom_call.1']
    #allocation6 [shape = 'u8[512]{0}', space=vmem, size = 0x400, scoped, tag = 'output window, operand 0, single buffered']
    %9 = vsyncpa [#allocation4], 0
    %10 = vsyncpa [#allocation5], 0
    // Predicated region
    $region2: #{tpu_custom_call.1} parent=1 // pred_check
      _
    $region3: #{tpu_custom_call.1} parent=1 // pred_check_branch
      %12 = sbr.rel (0) target = $region5
    $region4: #{tpu_custom_call.1} parent=1 // pred_region
      %s14 = ssub.s32 128, 128
      %15 = vsyncadd [#allocation4], %s14
      %s17 = sshll.u32 [#allocation3], 4
      %s18 = int_to_ptr.vmem [resolvable:$true] %s17
      %20 = dma.hbm_to_vmem [thread:$0]  %s0, 128, %s18, [#allocation4]
    $region5: #{tpu_custom_call.1} parent=1 // pred_fallthru
      _
    // Predicated region
    $region6: #{tpu_custom_call.1} parent=1 // pred_check
      _
    $region7: #{tpu_custom_call.1} parent=1 // pred_check_branch
      %22 = sbr.rel (0) target = $region9
    $region8: #{tpu_custom_call.1} parent=1 // pred_region
      _
    $region9: #{tpu_custom_call.1} parent=1 // pred_fallthru
      _
    // Predicated region
    $region10: #{tpu_custom_call.1} parent=1 // pred_check
      _
    $region11: #{tpu_custom_call.1} parent=1 // pred_check_branch
      %24 = sbr.rel (0) target = $region13
    $region12: #{tpu_custom_call.1} parent=1 // pred_region
      _
    $region13: #{tpu_custom_call.1} parent=1 // pred_fallthru
      _
    // Predicated region
    $region14: #{tpu_custom_call.1} parent=1 // pred_check
      _
    $region15: #{tpu_custom_call.1} parent=1 // pred_check_branch
      %26 = sbr.rel (0) target = $region17
    $region16: #{tpu_custom_call.1} parent=1 // pred_region
      %27 = dma.done [#allocation4], 128
    $region17: #{tpu_custom_call.1} parent=1 // pred_fallthru
      _
    %v28 = vld [vmem:[#allocation3] sm:$0xff]
    %v29 = vld [vmem:[%s1] sm:$0x1]
    %v31 = vlaneseq
    %v32 = vshrl.u32 %v31, 7
    %v33 = vsub.s32 0, %v32
    %v34 = vrot.slane %v29, %v33
    %v36 = vmul.f32 %v28, %v34
    %vm37 = vcmask 261120
    %v38 = vsel %vm37, %v36, 0.0
    %39 = vadd.xlane.f32.xlu0 %v38
    %v40 = vpop.xlane.xlu0 %39
    %s41 = sld [smem:[#allocation2]]
    %v42 = vstv %s41
    %v43 = vadd.f32 %v40, %v42
    %v44 = vmax.f32 %v43, 0.0
    %v46 = vlaneseq
    %v47 = vand.u32 %v46, 127
    %v48 = vlaneseq
    %v49 = vshrl.u32 %v48, 7
    %v50 = vsub.s32 %v47, %v49
    %v51 = vrot.slane %v44, %v50
    %vm53 = vcmask 57344
    %54 = vst.msk [vmem:[#allocation6] sm:$0x1] %vm53, %v51
    // Predicated region
    $region18: #{tpu_custom_call.1} parent=1 // pred_check
      _
    $region19: #{tpu_custom_call.1} parent=1 // pred_check_branch
      %56 = sbr.rel (0) target = $region21
    $region20: #{tpu_custom_call.1} parent=1 // pred_region
      %s58 = ssub.s32 16, 16
      %59 = vsyncadd [#allocation5], %s58
      %s61 = sshll.u32 [#allocation6], 4
      %s62 = int_to_ptr.vmem [resolvable:$true] %s61
      %64 = dma.vmem_to_hbm [thread:$0]  %s62, 16, %s3, [#allocation5]
    $region21: #{tpu_custom_call.1} parent=1 // pred_fallthru
      _
    // Predicated region
    $region22: #{tpu_custom_call.1} parent=1 // pred_check
      _
    $region23: #{tpu_custom_call.1} parent=1 // pred_check_branch
      %66 = sbr.rel (0) target = $region25
    $region24: #{tpu_custom_call.1} parent=1 // pred_region
      %67 = dma.done [#allocation5], 16
    $region25: #{tpu_custom_call.1} parent=1 // pred_fallthru
      _
    %68 = vsyncpa [#allocation4], 1
    %69 = vsyncpa [#allocation5], 1

</llo_original>
